<compile_context>
chip_gen: v7x
topology: tpu7x:2x2x1
jax: 0.10.0
libtpu: 0.0.40
codegen_flags: <defaults>
</compile_context>

<pallas_src>
import jax
import jax.numpy as jnp
from jax.experimental import pallas as pl
from jax.experimental.pallas import tpu as pltpu

BN_EPS = 1e-5


def _round_up(x, m):
    return ((x + m - 1) // m) * m


# --------------------------------------------------------------------------- #
# Kernels
# --------------------------------------------------------------------------- #
def nfm_fused_kernel(
    feat_ref, fv_ref,            # streamed: [TB, F] int32 ids, [TB, F] f32 values
    emb_ref, esq_ref,            # resident: [Vp, K] table, [Vp, K] table^2
    s0_ref, t0_ref,              # folded FM BatchNorm scale/shift      [1, K]
    w1_ref, b1_ref,              # folded Linear(K,H1)+BN               [K,H1],[1,H1]
    w2_ref, b2_ref,              # folded Linear(H1,H2)+BN              [H1,H2],[1,H2]
    wp_ref, bp_ref,              # prediction weight row [1,H2], bias [1,1]
    out_ref,                     # [TB, 1]
):
    tb, num_fields = feat_ref.shape
    vocab_p = emb_ref.shape[0]

    feat = feat_ref[...][:, :, None]                     # [TB, F, 1] int32
    fv = fv_ref[...][:, :, None]                         # [TB, F, 1] f32

    # In-kernel "gather" as a weighted multi-hot x table matmul (exact, handles
    # duplicate ids; removes the [B, F, K] HBM round trip entirely):
    #   s [b,k] = sum_f fv[b,f]   * E[feat[b,f], k]
    #   sq[b,k] = sum_f fv[b,f]^2 * E[feat[b,f], k]^2
    lane_id = jax.lax.broadcasted_iota(jnp.int32, (tb, num_fields, vocab_p), 2)
    hit = lane_id == feat                                # [TB, F, Vp]
    o1 = jnp.sum(jnp.where(hit, fv, 0.0), axis=1)        # [TB, Vp]
    o2 = jnp.sum(jnp.where(hit, fv * fv, 0.0), axis=1)   # [TB, Vp]

    s = jnp.dot(o1, emb_ref[...], preferred_element_type=jnp.float32)    # [TB, K]
    sq = jnp.dot(o2, esq_ref[...], preferred_element_type=jnp.float32)   # [TB, K]
    fm = 0.5 * (s * s - sq)                              # bi-interaction

    # FM_layers: BatchNorm1d (eval mode, folded) ; Dropout -> identity.
    # TODO(synk): training-mode dropout / BN running-stat updates not implemented.
    fm = fm * s0_ref[...] + t0_ref[...]

    # MLP: Linear(+folded BN) -> ReLU, twice.
    h = jnp.dot(fm, w1_ref[...], preferred_element_type=jnp.float32) + b1_ref[...]
    h = jnp.maximum(h, 0.0)
    h = jnp.dot(h, w2_ref[...], preferred_element_type=jnp.float32) + b2_ref[...]
    h = jnp.maximum(h, 0.0)

    # prediction Linear(H2, 1): VPU multiply + lane reduction (no N=1 MXU matmul).
    out_ref[...] = jnp.sum(h * wp_ref[...], axis=-1, keepdims=True) + bp_ref[...]


def nfm_stream_kernel(
    emb_ref, fv_ref,             # streamed: [TB, F, K] gathered embeddings, [TB, F]
    s0_ref, t0_ref, w1_ref, b1_ref, w2_ref, b2_ref, wp_ref, bp_ref,
    out_ref,                     # [TB, 1]
):
    emb = emb_ref[...].astype(jnp.float32)               # upcast if streamed bf16
    fv = fv_ref[...].astype(jnp.float32)                 # [TB, F]
    tb, num_fields, k = emb.shape

    # Single fused pass over the (small, static) field axis: each field slice
    # feeds both reductions while it is live in vregs.
    s = jnp.zeros((tb, k), jnp.float32)
    sq = jnp.zeros((tb, k), jnp.float32)
    for f in range(num_fields):
        ne = emb[:, f, :] * fv[:, f:f + 1]               # [TB, K]
        s = s + ne
        sq = sq + ne * ne
    fm = 0.5 * (s * s - sq)

    fm = fm * s0_ref[...] + t0_ref[...]
    h = jnp.dot(fm, w1_ref[...], preferred_element_type=jnp.float32) + b1_ref[...]
    h = jnp.maximum(h, 0.0)
    h = jnp.dot(h, w2_ref[...], preferred_element_type=jnp.float32) + b2_ref[...]
    h = jnp.maximum(h, 0.0)
    out_ref[...] = jnp.sum(h * wp_ref[...], axis=-1, keepdims=True) + bp_ref[...]


# --------------------------------------------------------------------------- #
# Sizing helpers
# --------------------------------------------------------------------------- #
def _vmem_limit_bytes():
    """Per-generation VMEM cap (v5e/v6e: 128 MiB physical, v7x: 64 MiB)."""
    try:
        cap = int(pltpu.get_tpu_info().vmem_capacity_bytes)
    except Exception:
        cap = 64 * 1024 * 1024           # conservative default (v7x physical size)
    return int(min(max(cap - 16 * 1024 * 1024, 32 * 1024 * 1024), 100 * 1024 * 1024))


def _choose_tb_fused(B, F, Vp, target_bytes=10 * 1024 * 1024):
    # One-hot temporaries [tb, F, Vp] (a few live copies) dominate per-tile VMEM.
    per_row = 5 * F * max(Vp, 128) * 4
    tb = max(8, min(1024, (target_bytes // per_row) // 8 * 8))
    tb = min(tb, _round_up(B, 8))
    if B >= 16:                          # >= 2 grid steps -> both v7x TCs get work
        tb = min(tb, _round_up((B + 1) // 2, 8))
    return max(8, tb)


def _choose_tb_stream(B, F, K, itemsize, target_bytes=6 * 1024 * 1024):
    # Padding-aware: the [tb, F, K] block is laid out in (sublane, lane) tiles,
    # so K pads to 128 lanes and F to 8 (f32) / 16 (bf16) sublanes.
    sublane = 8 * (4 // itemsize)
    per_row = _round_up(F, sublane) * _round_up(K, 128) * itemsize
    tb = max(8, min(2048, (target_bytes // per_row) // 8 * 8))
    tb = min(tb, _round_up(B, 8))
    if B >= 16:
        tb = min(tb, _round_up((B + 1) // 2, 8))
    return max(8, tb)


def _fold_bn(params):
    """Fold eval-mode BatchNorm into per-lane scales / Linear weights (wrapper side)."""
    inv0 = jax.lax.rsqrt(params["v0"] + BN_EPS)
    s0 = params["g0"] * inv0                                    # [1, K]
    t0 = params["b0"] - params["m0"] * s0                       # [1, K]

    inv1 = jax.lax.rsqrt(params["v1"] + BN_EPS)
    sc1 = params["g1"] * inv1                                   # [1, H1]
    w1f = params["w1"] * sc1                                    # [K, H1]
    b1f = (params["bb1"] - params["m1"]) * sc1 + params["be1"]  # [1, H1]

    inv2 = jax.lax.rsqrt(params["v2"] + BN_EPS)
    sc2 = params["g2"] * inv2                                   # [1, H2]
    w2f = params["w2"] * sc2                                    # [H1, H2]
    b2f = (params["bb2"] - params["m2"]) * sc2 + params["be2"]  # [1, H2]

    wp_row = params["wp"].reshape(1, -1)                        # [1, H2]
    bp = params["bp"]                                           # [1, 1]
    return s0, t0, w1f, b1f, w2f, b2f, wp_row, bp


# --------------------------------------------------------------------------- #
# Forward wrapper
# --------------------------------------------------------------------------- #
def nfm_forward(features, feature_values, params, *, tb=None, fuse_gather=None,
                stream_dtype=jnp.bfloat16, max_fused_vocab=4096):
    """features: [B, F] int32, feature_values: [B, F] f32 -> [B] f32 (eval mode)."""
    B, F = features.shape
    V, K = params["embeddings"].shape
    H1 = params["w1"].shape[1]
    H2 = params["w2"].shape[1]

    s0, t0, w1f, b1f, w2f, b2f, wp_row, bp = _fold_bn(params)
    weight_args = (s0, t0, w1f, b1f, w2f, b2f, wp_row, bp)
    const2d = lambda i: (0, 0)
    weight_specs = [
        pl.BlockSpec((1, K), const2d), pl.BlockSpec((1, K), const2d),      # s0, t0
        pl.BlockSpec((K, H1), const2d), pl.BlockSpec((1, H1), const2d),    # w1f, b1f
        pl.BlockSpec((H1, H2), const2d), pl.BlockSpec((1, H2), const2d),   # w2f, b2f
        pl.BlockSpec((1, H2), const2d), pl.BlockSpec((1, 1), const2d),     # wp, bp
    ]

    if fuse_gather is None:
        fuse_gather = V <= max_fused_vocab

    if fuse_gather:
        # ---- Fused-gather path: table VMEM-resident, only ids/values stream.
        Vp = _round_up(V, 128)
        table = params["embeddings"].astype(jnp.float32)
        if Vp != V:
            table = jnp.pad(table, ((0, Vp - V), (0, 0)))
        table_sq = table * table

        if tb is None:
            tb = _choose_tb_fused(B, F, Vp)
        Bp = _round_up(B, tb)
        feat = features.astype(jnp.int32)
        fv = feature_values.astype(jnp.float32)
        if Bp != B:
            feat = jnp.pad(feat, ((0, Bp - B), (0, 0)))
            fv = jnp.pad(fv, ((0, Bp - B), (0, 0)))

        flops = Bp * (4 * Vp * K + 2 * K * H1 + 2 * H1 * H2 + 2 * H2 + 6 * K)
        bytes_accessed = 4 * (2 * Bp * F + Bp + 2 * Vp * K
                              + K * H1 + H1 * H2 + 2 * K + 2 * H1 + 3 * H2 + 1)

        out = pl.pallas_call(
            nfm_fused_kernel,
            out_shape=jax.ShapeDtypeStruct((Bp, 1), jnp.float32),
            grid=(Bp // tb,),
            in_specs=[
                pl.BlockSpec((tb, F), lambda i: (i, 0)),      # feature ids  (streamed)
                pl.BlockSpec((tb, F), lambda i: (i, 0)),      # feature vals (streamed)
                pl.BlockSpec((Vp, K), const2d),               # emb table    (resident)
                pl.BlockSpec((Vp, K), const2d),               # emb table^2  (resident)
            ] + weight_specs,
            out_specs=pl.BlockSpec((tb, 1), lambda i: (i, 0)),
            compiler_params=pltpu.CompilerParams(
                dimension_semantics=("parallel",),
                vmem_limit_bytes=_vmem_limit_bytes(),
            ),
            cost_estimate=pl.CostEstimate(
                flops=int(flops), transcendentals=0,
                bytes_accessed=int(bytes_accessed)),
        )(feat, fv, table, table_sq, *weight_args)
        return out[:B, 0]  # FM.view(-1)

    # ---- Large-vocab fallback: XLA gather + streamed [B, F, K] embeddings.
    # TODO(synk): replace the XLA gather with an in-kernel manual DMA row-gather
    # (memory_space=pl.ANY table + double-buffered per-tile row copies) to remove
    # the remaining HBM round trip for very large vocabularies.
    stream_dtype = jnp.dtype(stream_dtype)
    if tb is None:
        tb = _choose_tb_stream(B, F, K, stream_dtype.itemsize)
    Bp = _round_up(B, tb)
    feat = features.astype(jnp.int32)
    fv = feature_values.astype(jnp.float32)
    if Bp != B:
        feat = jnp.pad(feat, ((0, Bp - B), (0, 0)))
        fv = jnp.pad(fv, ((0, Bp - B), (0, 0)))

    # Stream the gathered embeddings in a narrow dtype (bf16 default) to halve
    # the dominant HBM bytes; the kernel upcasts to f32 before the FM math.
    emb = jnp.take(params["embeddings"], feat, axis=0).astype(stream_dtype)  # [Bp,F,K]

    flops = Bp * (4 * F * K + 2 * K * H1 + 2 * H1 * H2 + 2 * H2 + 6 * K)
    bytes_accessed = (Bp * F * K * stream_dtype.itemsize
                      + 4 * (Bp * F + Bp + K * H1 + H1 * H2
                             + 2 * K + 2 * H1 + 3 * H2 + 1))

    out = pl.pallas_call(
        nfm_stream_kernel,
        out_shape=jax.ShapeDtypeStruct((Bp, 1), jnp.float32),
        grid=(Bp // tb,),
        in_specs=[
            pl.BlockSpec((tb, F, K), lambda i: (i, 0, 0)),    # embeddings (streamed)
            pl.BlockSpec((tb, F), lambda i: (i, 0)),          # values     (streamed)
        ] + weight_specs,
        out_specs=pl.BlockSpec((tb, 1), lambda i: (i, 0)),
        compiler_params=pltpu.CompilerParams(
            dimension_semantics=("parallel",),
            vmem_limit_bytes=_vmem_limit_bytes(),
        ),
        cost_estimate=pl.CostEstimate(
            flops=int(flops), transcendentals=0, bytes_accessed=int(bytes_accessed)),
    )(emb, fv, *weight_args)
    return out[:B, 0]  # FM.view(-1)


# --------------------------------------------------------------------------- #
# Params / reference
# --------------------------------------------------------------------------- #
def make_params(key, num_features, num_factors, layers):
    """Deterministic parameter init mimicking the module's __init__ (eval mode)."""
    ks = jax.random.split(key, 8)
    K = num_factors
    H1, H2 = layers

    def xavier_normal(k, fan_in, fan_out):
        std = (2.0 / (fan_in + fan_out)) ** 0.5
        return jax.random.normal(k, (fan_in, fan_out), jnp.float32) * std

    params = {
        # feature_emb (copied into nn.Embedding weights)
        "embeddings": jax.random.normal(ks[0], (num_features, K), jnp.float32) * 0.1,
        # FM BatchNorm1d(K): eval-mode running stats
        "g0": jnp.ones((1, K), jnp.float32),
        "b0": jnp.zeros((1, K), jnp.float32),
        "m0": jnp.zeros((1, K), jnp.float32),
        "v0": jnp.ones((1, K), jnp.float32),
        # MLP layer 1: Linear(K, H1) + BN(H1)
        "w1": xavier_normal(ks[1], K, H1),
        "bb1": jnp.zeros((1, H1), jnp.float32),
        "g1": jnp.ones((1, H1), jnp.float32),
        "be1": jnp.zeros((1, H1), jnp.float32),
        "m1": jnp.zeros((1, H1), jnp.float32),
        "v1": jnp.ones((1, H1), jnp.float32),
        # MLP layer 2: Linear(H1, H2) + BN(H2)
        "w2": xavier_normal(ks[2], H1, H2),
        "bb2": jnp.zeros((1, H2), jnp.float32),
        "g2": jnp.ones((1, H2), jnp.float32),
        "be2": jnp.zeros((1, H2), jnp.float32),
        "m2": jnp.zeros((1, H2), jnp.float32),
        "v2": jnp.ones((1, H2), jnp.float32),
        # prediction: Linear(H2, 1), xavier weight, zero bias
        "wp": xavier_normal(ks[3], H2, 1),
        "bp": jnp.zeros((1, 1), jnp.float32),
    }
    return params


def nfm_reference(features, feature_values, params):
    """Pure-JAX reference (unfolded BN) of the same forward pass."""
    emb = jnp.take(params["embeddings"], features, axis=0)
    ne = emb * feature_values[..., None]
    s = jnp.sum(ne, axis=1)
    sq = jnp.sum(ne * ne, axis=1)
    fm = 0.5 * (s * s - sq)
    fm = (fm - params["m0"]) / jnp.sqrt(params["v0"] + BN_EPS) * params["g0"] + params["b0"]
    h = fm @ params["w1"] + params["bb1"]
    h = (h - params["m1"]) / jnp.sqrt(params["v1"] + BN_EPS) * params["g1"] + params["be1"]
    h = jnp.maximum(h, 0.0)
    h = h @ params["w2"] + params["bb2"]
    h = (h - params["m2"]) / jnp.sqrt(params["v2"] + BN_EPS) * params["g2"] + params["be2"]
    h = jnp.maximum(h, 0.0)
    return (h @ params["wp"] + params["bp"]).reshape(-1)


if __name__ == "__main__":
    # Small config: vocab=50, B=8 examples, F=8 fields, num_factors=32,
    # layers=[64, 32], act='relu', batch_norm=True (eval mode).
    num_features, num_factors = 50, 32
    layers = [64, 32]
    B, F = 8, 8

    key = jax.random.PRNGKey(0)
    k_par, k_feat, k_val = jax.random.split(key, 3)

    params = make_params(k_par, num_features, num_factors, layers)
    features = jax.random.randint(k_feat, (B, F), 0, num_features, dtype=jnp.int32)
    feature_values = jax.random.uniform(k_val, (B, F), jnp.float32)

    ref = nfm_reference(features, feature_values, params)

    # Default path: fused in-kernel gather (table VMEM-resident).
    out = jax.block_until_ready(nfm_forward(features, feature_values, params))
    assert out.shape == (B,), out.shape
    assert jnp.allclose(out, ref, atol=1e-3, rtol=1e-3), (out, ref)

    # Large-vocab fallback path (streamed embeddings); exercised here with f32
    # streaming so the comparison stays exact (bf16 is the production default).
    out_stream = jax.block_until_ready(
        nfm_forward(features, feature_values, params,
                    fuse_gather=False, stream_dtype=jnp.float32))
    assert out_stream.shape == (B,), out_stream.shape
    assert jnp.allclose(out_stream, ref, atol=1e-4, rtol=1e-4), (out_stream, ref)

    print("KERNEL_OK")
</pallas_src>

<mosaic_0001>
module attributes {stable_mosaic.version = 11 : i64} {
  func.func @nfm_fused_kernel(%arg0: i32, %arg1: memref<8x8xi32, #tpu.memory_space<vmem>>, %arg2: memref<8x8xf32, #tpu.memory_space<vmem>>, %arg3: memref<128x32xf32, #tpu.memory_space<vmem>>, %arg4: memref<128x32xf32, #tpu.memory_space<vmem>>, %arg5: memref<1x32xf32, #tpu.memory_space<vmem>>, %arg6: memref<1x32xf32, #tpu.memory_space<vmem>>, %arg7: memref<32x64xf32, #tpu.memory_space<vmem>>, %arg8: memref<1x64xf32, #tpu.memory_space<vmem>>, %arg9: memref<64x32xf32, #tpu.memory_space<vmem>>, %arg10: memref<1x32xf32, #tpu.memory_space<vmem>>, %arg11: memref<1x32xf32, #tpu.memory_space<vmem>>, %arg12: memref<1x1xf32, #tpu.memory_space<vmem>>, %arg13: memref<8x1xf32, #tpu.memory_space<vmem>>) attributes {dimension_semantics = [#tpu.dimension_semantics<parallel>], iteration_bounds = array<i64: 1>, scalar_prefetch = 0 : i64, scratch_operands = 0 : i64, tpu.core_type = #tpu.core_type<tc>, window_params = [{transform_indices = @transform_0, window_bounds = array<i64: 8, 8>}, {transform_indices = @transform_1, window_bounds = array<i64: 8, 8>}, {pipeline_mode = #tpu.pipeline_mode<synchronous>, transform_indices = @transform_2, window_bounds = array<i64: 128, 32>}, {pipeline_mode = #tpu.pipeline_mode<synchronous>, transform_indices = @transform_3, window_bounds = array<i64: 128, 32>}, {pipeline_mode = #tpu.pipeline_mode<synchronous>, transform_indices = @transform_4, window_bounds = array<i64: 1, 32>}, {pipeline_mode = #tpu.pipeline_mode<synchronous>, transform_indices = @transform_5, window_bounds = array<i64: 1, 32>}, {pipeline_mode = #tpu.pipeline_mode<synchronous>, transform_indices = @transform_6, window_bounds = array<i64: 32, 64>}, {pipeline_mode = #tpu.pipeline_mode<synchronous>, transform_indices = @transform_7, window_bounds = array<i64: 1, 64>}, {pipeline_mode = #tpu.pipeline_mode<synchronous>, transform_indices = @transform_8, window_bounds = array<i64: 64, 32>}, {pipeline_mode = #tpu.pipeline_mode<synchronous>, transform_indices = @transform_9, window_bounds = array<i64: 1, 32>}, {pipeline_mode = #tpu.pipeline_mode<synchronous>, transform_indices = @transform_10, window_bounds = array<i64: 1, 32>}, {pipeline_mode = #tpu.pipeline_mode<synchronous>, transform_indices = @transform_11, window_bounds = array<i64: 1, 1>}, {transform_indices = @transform_12, window_bounds = array<i64: 8, 1>}]} {
    %c0 = arith.constant 0 : index
    %c0_0 = arith.constant 0 : index
    %0 = vector.load %arg1[%c0, %c0_0] : memref<8x8xi32, #tpu.memory_space<vmem>>, vector<8x8xi32>
    %1 = vector.shape_cast %0 : vector<8x8xi32> to vector<8x8x1xi32>
    %c0_1 = arith.constant 0 : index
    %c0_2 = arith.constant 0 : index
    %2 = vector.load %arg2[%c0_1, %c0_2] : memref<8x8xf32, #tpu.memory_space<vmem>>, vector<8x8xf32>
    %3 = vector.shape_cast %2 : vector<8x8xf32> to vector<8x8x1xf32>
    %4 = tpu.iota {dimensions = array<i32: 2>} : vector<8x8x128xi32>
    %5 = vector.broadcast %1 : vector<8x8x1xi32> to vector<8x8x128xi32>
    %6 = arith.cmpi eq, %4, %5 : vector<8x8x128xi32>
    %cst = arith.constant 0.000000e+00 : f32
    %7 = vector.shape_cast %3 : vector<8x8x1xf32> to vector<8x8x1xf32>
    %8 = vector.broadcast %7 : vector<8x8x1xf32> to vector<8x8x128xf32>
    %9 = vector.broadcast %cst : f32 to vector<8x8x128xf32>
    %10 = arith.select %6, %8, %9 : vector<8x8x128xi1>, vector<8x8x128xf32>
    %cst_3 = arith.constant dense<0.000000e+00> : vector<8x128xf32>
    %11 = vector.multi_reduction <add>, %10, %cst_3 [1] : vector<8x8x128xf32> to vector<8x128xf32>
    %12 = arith.mulf %3, %3 : vector<8x8x1xf32>
    %cst_4 = arith.constant 0.000000e+00 : f32
    %13 = vector.shape_cast %12 : vector<8x8x1xf32> to vector<8x8x1xf32>
    %14 = vector.broadcast %13 : vector<8x8x1xf32> to vector<8x8x128xf32>
    %15 = vector.broadcast %cst_4 : f32 to vector<8x8x128xf32>
    %16 = arith.select %6, %14, %15 : vector<8x8x128xi1>, vector<8x8x128xf32>
    %cst_5 = arith.constant dense<0.000000e+00> : vector<8x128xf32>
    %17 = vector.multi_reduction <add>, %16, %cst_5 [1] : vector<8x8x128xf32> to vector<8x128xf32>
    %c0_6 = arith.constant 0 : index
    %c0_7 = arith.constant 0 : index
    %18 = vector.load %arg3[%c0_6, %c0_7] : memref<128x32xf32, #tpu.memory_space<vmem>>, vector<128x32xf32>
    %cst_8 = arith.constant dense<0.000000e+00> : vector<8x32xf32>
    %19 = tpu.matmul %11, %18, %cst_8 {dimension_numbers = #tpu.dot_dimension_numbers<[1], [0], [0], [1], [0, 0, 1, 1], [], []>} : vector<8x128xf32>, vector<128x32xf32>, vector<8x32xf32> -> vector<8x32xf32>
    %c0_9 = arith.constant 0 : index
    %c0_10 = arith.constant 0 : index
    %20 = vector.load %arg4[%c0_9, %c0_10] : memref<128x32xf32, #tpu.memory_space<vmem>>, vector<128x32xf32>
    %cst_11 = arith.constant dense<0.000000e+00> : vector<8x32xf32>
    %21 = tpu.matmul %17, %20, %cst_11 {dimension_numbers = #tpu.dot_dimension_numbers<[1], [0], [0], [1], [0, 0, 1, 1], [], []>} : vector<8x128xf32>, vector<128x32xf32>, vector<8x32xf32> -> vector<8x32xf32>
    %22 = arith.mulf %19, %19 : vector<8x32xf32>
    %23 = arith.subf %22, %21 : vector<8x32xf32>
    %cst_12 = arith.constant 5.000000e-01 : f32
    %24 = vector.broadcast %cst_12 : f32 to vector<8x32xf32>
    %25 = arith.mulf %24, %23 : vector<8x32xf32>
    %c0_13 = arith.constant 0 : index
    %c0_14 = arith.constant 0 : index
    %26 = vector.load %arg5[%c0_13, %c0_14] : memref<1x32xf32, #tpu.memory_space<vmem>>, vector<1x32xf32>
    %27 = vector.broadcast %26 : vector<1x32xf32> to vector<8x32xf32>
    %28 = arith.mulf %25, %27 : vector<8x32xf32>
    %c0_15 = arith.constant 0 : index
    %c0_16 = arith.constant 0 : index
    %29 = vector.load %arg6[%c0_15, %c0_16] : memref<1x32xf32, #tpu.memory_space<vmem>>, vector<1x32xf32>
    %30 = vector.broadcast %29 : vector<1x32xf32> to vector<8x32xf32>
    %31 = arith.addf %28, %30 : vector<8x32xf32>
    %c0_17 = arith.constant 0 : index
    %c0_18 = arith.constant 0 : index
    %32 = vector.load %arg7[%c0_17, %c0_18] : memref<32x64xf32, #tpu.memory_space<vmem>>, vector<32x64xf32>
    %cst_19 = arith.constant dense<0.000000e+00> : vector<8x64xf32>
    %33 = tpu.matmul %31, %32, %cst_19 {dimension_numbers = #tpu.dot_dimension_numbers<[1], [0], [0], [1], [0, 0, 1, 1], [], []>} : vector<8x32xf32>, vector<32x64xf32>, vector<8x64xf32> -> vector<8x64xf32>
    %c0_20 = arith.constant 0 : index
    %c0_21 = arith.constant 0 : index
    %34 = vector.load %arg8[%c0_20, %c0_21] : memref<1x64xf32, #tpu.memory_space<vmem>>, vector<1x64xf32>
    %35 = vector.broadcast %34 : vector<1x64xf32> to vector<8x64xf32>
    %36 = arith.addf %33, %35 : vector<8x64xf32>
    %cst_22 = arith.constant 0.000000e+00 : f32
    %37 = vector.broadcast %cst_22 : f32 to vector<8x64xf32>
    %38 = arith.maximumf %36, %37 : vector<8x64xf32>
    %c0_23 = arith.constant 0 : index
    %c0_24 = arith.constant 0 : index
    %39 = vector.load %arg9[%c0_23, %c0_24] : memref<64x32xf32, #tpu.memory_space<vmem>>, vector<64x32xf32>
    %cst_25 = arith.constant dense<0.000000e+00> : vector<8x32xf32>
    %40 = tpu.matmul %38, %39, %cst_25 {dimension_numbers = #tpu.dot_dimension_numbers<[1], [0], [0], [1], [0, 0, 1, 1], [], []>} : vector<8x64xf32>, vector<64x32xf32>, vector<8x32xf32> -> vector<8x32xf32>
    %c0_26 = arith.constant 0 : index
    %c0_27 = arith.constant 0 : index
    %41 = vector.load %arg10[%c0_26, %c0_27] : memref<1x32xf32, #tpu.memory_space<vmem>>, vector<1x32xf32>
    %42 = vector.broadcast %41 : vector<1x32xf32> to vector<8x32xf32>
    %43 = arith.addf %40, %42 : vector<8x32xf32>
    %cst_28 = arith.constant 0.000000e+00 : f32
    %44 = vector.broadcast %cst_28 : f32 to vector<8x32xf32>
    %45 = arith.maximumf %43, %44 : vector<8x32xf32>
    %c0_29 = arith.constant 0 : index
    %c0_30 = arith.constant 0 : index
    %46 = vector.load %arg11[%c0_29, %c0_30] : memref<1x32xf32, #tpu.memory_space<vmem>>, vector<1x32xf32>
    %47 = vector.broadcast %46 : vector<1x32xf32> to vector<8x32xf32>
    %48 = arith.mulf %45, %47 : vector<8x32xf32>
    %cst_31 = arith.constant dense<0.000000e+00> : vector<8xf32>
    %49 = vector.multi_reduction <add>, %48, %cst_31 [1] : vector<8x32xf32> to vector<8xf32>
    %50 = vector.shape_cast %49 : vector<8xf32> to vector<8x1xf32>
    %c0_32 = arith.constant 0 : index
    %c0_33 = arith.constant 0 : index
    %51 = vector.load %arg12[%c0_32, %c0_33] : memref<1x1xf32, #tpu.memory_space<vmem>>, vector<1x1xf32>
    %52 = vector.broadcast %51 : vector<1x1xf32> to vector<8x1xf32>
    %53 = arith.addf %50, %52 : vector<8x1xf32>
    %c0_34 = arith.constant 0 : index
    %c0_35 = arith.constant 0 : index
    %54 = vector.load %arg13[%c0_34, %c0_35] : memref<8x1xf32, #tpu.memory_space<vmem>>, vector<8x1xf32>
    tpu.vector_store %arg13[%c0_34, %c0_35], %53 {strides = array<i32>} : memref<8x1xf32, #tpu.memory_space<vmem>>, vector<8x1xf32>,
    return
  }
  func.func @transform_0(%arg0: i32) -> (i32, i32) {
    %c0_i32 = arith.constant 0 : i32
    %c0_i32_0 = arith.constant 0 : i32
    return %arg0, %c0_i32 : i32, i32
  }
  func.func @transform_1(%arg0: i32) -> (i32, i32) {
    %c0_i32 = arith.constant 0 : i32
    %c0_i32_0 = arith.constant 0 : i32
    return %arg0, %c0_i32 : i32, i32
  }
  func.func @transform_2(%arg0: i32) -> (i32, i32) {
    %c0_i32 = arith.constant 0 : i32
    %c0_i32_0 = arith.constant 0 : i32
    %c0_i32_1 = arith.constant 0 : i32
    return %c0_i32, %c0_i32_0 : i32, i32
  }
  func.func @transform_3(%arg0: i32) -> (i32, i32) {
    %c0_i32 = arith.constant 0 : i32
    %c0_i32_0 = arith.constant 0 : i32
    %c0_i32_1 = arith.constant 0 : i32
    return %c0_i32, %c0_i32_0 : i32, i32
  }
  func.func @transform_4(%arg0: i32) -> (i32, i32) {
    %c0_i32 = arith.constant 0 : i32
    %c0_i32_0 = arith.constant 0 : i32
    %c0_i32_1 = arith.constant 0 : i32
    return %c0_i32, %c0_i32_0 : i32, i32
  }
  func.func @transform_5(%arg0: i32) -> (i32, i32) {
    %c0_i32 = arith.constant 0 : i32
    %c0_i32_0 = arith.constant 0 : i32
    %c0_i32_1 = arith.constant 0 : i32
    return %c0_i32, %c0_i32_0 : i32, i32
  }
  func.func @transform_6(%arg0: i32) -> (i32, i32) {
    %c0_i32 = arith.constant 0 : i32
    %c0_i32_0 = arith.constant 0 : i32
    %c0_i32_1 = arith.constant 0 : i32
    return %c0_i32, %c0_i32_0 : i32, i32
  }
  func.func @transform_7(%arg0: i32) -> (i32, i32) {
    %c0_i32 = arith.constant 0 : i32
    %c0_i32_0 = arith.constant 0 : i32
    %c0_i32_1 = arith.constant 0 : i32
    return %c0_i32, %c0_i32_0 : i32, i32
  }
  func.func @transform_8(%arg0: i32) -> (i32, i32) {
    %c0_i32 = arith.constant 0 : i32
    %c0_i32_0 = arith.constant 0 : i32
    %c0_i32_1 = arith.constant 0 : i32
    return %c0_i32, %c0_i32_0 : i32, i32
  }
  func.func @transform_9(%arg0: i32) -> (i32, i32) {
    %c0_i32 = arith.constant 0 : i32
    %c0_i32_0 = arith.constant 0 : i32
    %c0_i32_1 = arith.constant 0 : i32
    return %c0_i32, %c0_i32_0 : i32, i32
  }
  func.func @transform_10(%arg0: i32) -> (i32, i32) {
    %c0_i32 = arith.constant 0 : i32
    %c0_i32_0 = arith.constant 0 : i32
    %c0_i32_1 = arith.constant 0 : i32
    return %c0_i32, %c0_i32_0 : i32, i32
  }
  func.func @transform_11(%arg0: i32) -> (i32, i32) {
    %c0_i32 = arith.constant 0 : i32
    %c0_i32_0 = arith.constant 0 : i32
    %c0_i32_1 = arith.constant 0 : i32
    return %c0_i32, %c0_i32_0 : i32, i32
  }
  func.func @transform_12(%arg0: i32) -> (i32, i32) {
    %c0_i32 = arith.constant 0 : i32
    %c0_i32_0 = arith.constant 0 : i32
    return %arg0, %c0_i32 : i32, i32
  }
}

</mosaic_0001>

<llo_original>
// kernel: tpu_custom_call.1
$region0: #{tpu_custom_call.1}
  #allocation0 [shape = 'u32[]', space=smem, size = 0x4, offset = 0x4, fixed_abs, tag = 'smem constant byte address 0x4 - core index']
  #allocation1 [shape = 'u32[144,128]{1,0:T(1,128)}', space=vmem, size = 0x12000, scoped, tag = 'internal scratch']
  #allocation2 [shape = 'f32[1,1]{1,0:T(1,128)S(1)}', space=vmem, size = 0x200, scoped, tag = 'scoped memory for tpu_custom_call.1']
  %s0 = inlined_call_operand.vmem [shape: s32[8,8], index: 0, kind: input, shape index: {}]
  %s1 = inlined_call_operand.vmem [shape: f32[8,8], index: 1, kind: input, shape index: {}]
  %s2 = inlined_call_operand.vmem [shape: f32[128,32], index: 2, kind: input, shape index: {}]
  %s3 = inlined_call_operand.vmem [shape: f32[128,32], index: 3, kind: input, shape index: {}]
  %s4 = inlined_call_operand.vmem [shape: f32[1,32], index: 4, kind: input, shape index: {}]
  %s5 = inlined_call_operand.vmem [shape: f32[1,32], index: 5, kind: input, shape index: {}]
  %s6 = inlined_call_operand.vmem [shape: f32[32,64], index: 6, kind: input, shape index: {}]
  %s7 = inlined_call_operand.vmem [shape: f32[1,64], index: 7, kind: input, shape index: {}]
  %s8 = inlined_call_operand.vmem [shape: f32[64,32], index: 8, kind: input, shape index: {}]
  %s9 = inlined_call_operand.vmem [shape: f32[1,32], index: 9, kind: input, shape index: {}]
  %s10 = inlined_call_operand.vmem [shape: f32[1,32], index: 10, kind: input, shape index: {}]
  %s11 = inlined_call_operand.<no memory space> [shape: f32[1,1], index: 11, kind: input, shape index: {}]
  %s12 = inlined_call_operand.vmem [shape: f32[8,1], index: 12, kind: output, shape index: {}]
  %s13 = sld [smem:[#allocation0]]
  $region58: #{tpu_custom_call.1} parent=0
    _
  %s15 = ssub.s32 1, %s13
  %s16 = scalar_select 0, %s15, %s13
  %v17 = vstv %s11
  %18 = vst [vmem:[#allocation2] sm:$0x1] %v17
  // Predicated region
  $region2: #{tpu_custom_call.1} parent=0 // pred_check
    _
  $region3: #{tpu_custom_call.1} parent=0 // pred_check_branch
    %20 = sbr.rel (0) target = $region5
  $region4: #{tpu_custom_call.1} parent=0 // pred_region
    _
  $region5: #{tpu_custom_call.1} parent=0 // pred_fallthru
    _
  // Predicated region
  $region6: #{tpu_custom_call.1} parent=0 // pred_check
    _
  $region7: #{tpu_custom_call.1} parent=0 // pred_check_branch
    %22 = sbr.rel (0) target = $region9
  $region8: #{tpu_custom_call.1} parent=0 // pred_region
    _
  $region9: #{tpu_custom_call.1} parent=0 // pred_fallthru
    _
  // Predicated region
  $region10: #{tpu_custom_call.1} parent=0 // pred_check
    _
  $region11: #{tpu_custom_call.1} parent=0 // pred_check_branch
    %24 = sbr.rel (0) target = $region13
  $region12: #{tpu_custom_call.1} parent=0 // pred_region
    _
  $region13: #{tpu_custom_call.1} parent=0 // pred_fallthru
    _
  // Predicated region
  $region14: #{tpu_custom_call.1} parent=0 // pred_check
    _
  $region15: #{tpu_custom_call.1} parent=0 // pred_check_branch
    %26 = sbr.rel (0) target = $region17
  $region16: #{tpu_custom_call.1} parent=0 // pred_region
    _
  $region17: #{tpu_custom_call.1} parent=0 // pred_fallthru
    _
  // Predicated region
  $region18: #{tpu_custom_call.1} parent=0 // pred_check
    _
  $region19: #{tpu_custom_call.1} parent=0 // pred_check_branch
    %28 = sbr.rel (0) target = $region21
  $region20: #{tpu_custom_call.1} parent=0 // pred_region
    _
  $region21: #{tpu_custom_call.1} parent=0 // pred_fallthru
    _
  // Predicated region
  $region22: #{tpu_custom_call.1} parent=0 // pred_check
    _
  $region23: #{tpu_custom_call.1} parent=0 // pred_check_branch
    %30 = sbr.rel (0) target = $region25
  $region24: #{tpu_custom_call.1} parent=0 // pred_region
    _
  $region25: #{tpu_custom_call.1} parent=0 // pred_fallthru
    _
  // Predicated region
  $region26: #{tpu_custom_call.1} parent=0 // pred_check
    _
  $region27: #{tpu_custom_call.1} parent=0 // pred_check_branch
    %32 = sbr.rel (0) target = $region29
  $region28: #{tpu_custom_call.1} parent=0 // pred_region
    _
  $region29: #{tpu_custom_call.1} parent=0 // pred_fallthru
    _
  // Predicated region
  $region30: #{tpu_custom_call.1} parent=0 // pred_check
    _
  $region31: #{tpu_custom_call.1} parent=0 // pred_check_branch
    %34 = sbr.rel (0) target = $region33
  $region32: #{tpu_custom_call.1} parent=0 // pred_region
    _
  $region33: #{tpu_custom_call.1} parent=0 // pred_fallthru
    _
  // Predicated region
  $region34: #{tpu_custom_call.1} parent=0 // pred_check
    _
  $region35: #{tpu_custom_call.1} parent=0 // pred_check_branch
    %36 = sbr.rel (0) target = $region37
  $region36: #{tpu_custom_call.1} parent=0 // pred_region
    _
  $region37: #{tpu_custom_call.1} parent=0 // pred_fallthru
    _
  // Predicated region
  $region38: #{tpu_custom_call.1} parent=0 // pred_check
    _
  $region39: #{tpu_custom_call.1} parent=0 // pred_check_branch
    %38 = sbr.rel (0) target = $region41
  $region40: #{tpu_custom_call.1} parent=0 // pred_region
    _
  $region41: #{tpu_custom_call.1} parent=0 // pred_fallthru
    _
  // Predicated region
  $region42: #{tpu_custom_call.1} parent=0 // pred_check
    _
  $region43: #{tpu_custom_call.1} parent=0 // pred_check_branch
    %40 = sbr.rel (0) target = $region45
  $region44: #{tpu_custom_call.1} parent=0 // pred_region
    _
  $region45: #{tpu_custom_call.1} parent=0 // pred_fallthru
    _
  // Predicated region
  $region46: #{tpu_custom_call.1} parent=0 // pred_check
    _
  $region47: #{tpu_custom_call.1} parent=0 // pred_check_branch
    %42 = sbr.rel (0) target = $region49
  $region48: #{tpu_custom_call.1} parent=0 // pred_region
    _
  $region49: #{tpu_custom_call.1} parent=0 // pred_fallthru
    _
  %v43 = vld [vmem:[%s0] sm:$0xff]
  %v44 = vlaneseq
  %v45 = vshrl.u32 %v44, 7
  %v46 = vsub.s32 0, %v45
  %v47 = vrot.slane %v43, %v46
  %49 = vbcast.lane.b32.xlu0 %v47, 256
  %v50 = vpop.permute.xlu0 %49
  %v51 = vlaneseq
  %v52 = vshrl.u32 %v51, 7
  %v53 = vsub.s32 1, %v52
  %v54 = vrot.slane %v43, %v53
  %56 = vbcast.lane.b32.xlu0 %v54, 256
  %v57 = vpop.permute.xlu0 %56
  %v58 = vlaneseq
  %v59 = vshrl.u32 %v58, 7
  %v60 = vsub.s32 2, %v59
  %v61 = vrot.slane %v43, %v60
  %63 = vbcast.lane.b32.xlu0 %v61, 256
  %v64 = vpop.permute.xlu0 %63
  %v65 = vlaneseq
  %v66 = vshrl.u32 %v65, 7
  %v67 = vsub.s32 3, %v66
  %v68 = vrot.slane %v43, %v67
  %70 = vbcast.lane.b32.xlu0 %v68, 256
  %v71 = vpop.permute.xlu0 %70
  %v72 = vlaneseq
  %v73 = vshrl.u32 %v72, 7
  %v74 = vsub.s32 4, %v73
  %v75 = vrot.slane %v43, %v74
  %77 = vbcast.lane.b32.xlu0 %v75, 256
  %v78 = vpop.permute.xlu0 %77
  %v79 = vlaneseq
  %v80 = vshrl.u32 %v79, 7
  %v81 = vsub.s32 5, %v80
  %v82 = vrot.slane %v43, %v81
  %84 = vbcast.lane.b32.xlu0 %v82, 256
  %v85 = vpop.permute.xlu0 %84
  %v86 = vlaneseq
  %v87 = vshrl.u32 %v86, 7
  %v88 = vsub.s32 6, %v87
  %v89 = vrot.slane %v43, %v88
  %91 = vbcast.lane.b32.xlu0 %v89, 256
  %v92 = vpop.permute.xlu0 %91
  %v93 = vlaneseq
  %v94 = vshrl.u32 %v93, 7
  %v95 = vsub.s32 7, %v94
  %v96 = vrot.slane %v43, %v95
  %98 = vbcast.lane.b32.xlu0 %v96, 256
  %v99 = vpop.permute.xlu0 %98
  %v100 = vld [vmem:[%s1] sm:$0xff]
  %v101 = vlaneseq
  %v102 = vshrl.u32 %v101, 7
  %v103 = vsub.s32 0, %v102
  %v104 = vrot.slane %v100, %v103
  %106 = vbcast.lane.b32.xlu0 %v104, 256
  %v107 = vpop.permute.xlu0 %106
  %v108 = vlaneseq
  %v109 = vshrl.u32 %v108, 7
  %v110 = vsub.s32 1, %v109
  %v111 = vrot.slane %v100, %v110
  %113 = vbcast.lane.b32.xlu0 %v111, 256
  %v114 = vpop.permute.xlu0 %113
  %v115 = vlaneseq
  %v116 = vshrl.u32 %v115, 7
  %v117 = vsub.s32 2, %v116
  %v118 = vrot.slane %v100, %v117
  %120 = vbcast.lane.b32.xlu0 %v118, 256
  %v121 = vpop.permute.xlu0 %120
  %v122 = vlaneseq
  %v123 = vshrl.u32 %v122, 7
  %v124 = vsub.s32 3, %v123
  %v125 = vrot.slane %v100, %v124
  %127 = vbcast.lane.b32.xlu0 %v125, 256
  %v128 = vpop.permute.xlu0 %127
  %v129 = vlaneseq
  %v130 = vshrl.u32 %v129, 7
  %v131 = vsub.s32 4, %v130
  %v132 = vrot.slane %v100, %v131
  %134 = vbcast.lane.b32.xlu0 %v132, 256
  %v135 = vpop.permute.xlu0 %134
  %v136 = vlaneseq
  %v137 = vshrl.u32 %v136, 7
  %v138 = vsub.s32 5, %v137
  %v139 = vrot.slane %v100, %v138
  %141 = vbcast.lane.b32.xlu0 %v139, 256
  %v142 = vpop.permute.xlu0 %141
  %v143 = vlaneseq
  %v144 = vshrl.u32 %v143, 7
  %v145 = vsub.s32 6, %v144
  %v146 = vrot.slane %v100, %v145
  %148 = vbcast.lane.b32.xlu0 %v146, 256
  %v149 = vpop.permute.xlu0 %148
  %v150 = vlaneseq
  %v151 = vshrl.u32 %v150, 7
  %v152 = vsub.s32 7, %v151
  %v153 = vrot.slane %v100, %v152
  %155 = vbcast.lane.b32.xlu0 %v153, 256
  %v156 = vpop.permute.xlu0 %155
  %v157 = vlaneseq
  %v158 = vand.u32 %v157, 127
  %vm159 = vcmp.eq.s32.totalorder %v158, %v50
  %vm160 = vcmp.eq.s32.totalorder %v158, %v57
  %vm161 = vcmp.eq.s32.totalorder %v158, %v64
  %vm162 = vcmp.eq.s32.totalorder %v158, %v71
  %vm163 = vcmp.eq.s32.totalorder %v158, %v78
  %vm164 = vcmp.eq.s32.totalorder %v158, %v85
  %vm165 = vcmp.eq.s32.totalorder %v158, %v92
  %vm166 = vcmp.eq.s32.totalorder %v158, %v99
  %v167 = vsel %vm159, %v107, 0.0
  %v168 = vsel %vm160, %v114, 0.0
  %v169 = vsel %vm161, %v121, 0.0
  %v170 = vsel %vm162, %v128, 0.0
  %v171 = vsel %vm163, %v135, 0.0
  %v172 = vsel %vm164, %v142, 0.0
  %v173 = vsel %vm165, %v149, 0.0
  %v174 = vsel %vm166, %v156, 0.0
  %v175 = vrot.slane %v167, 4
  %v176 = vadd.f32 %v167, %v175
  %v177 = vrot.slane %v176, 2
  %v178 = vadd.f32 %v176, %v177
  %v179 = vrot.slane %v178, 1
  %v180 = vadd.f32 %v178, %v179
  %v181 = vrot.slane %v168, 4
  %v182 = vadd.f32 %v168, %v181
  %v183 = vrot.slane %v182, 2
  %v184 = vadd.f32 %v182, %v183
  %v185 = vrot.slane %v184, 1
  %v186 = vadd.f32 %v184, %v185
  %v187 = vrot.slane %v169, 4
  %v188 = vadd.f32 %v169, %v187
  %v189 = vrot.slane %v188, 2
  %v190 = vadd.f32 %v188, %v189
  %v191 = vrot.slane %v190, 1
  %v192 = vadd.f32 %v190, %v191
  %v193 = vrot.slane %v170, 4
  %v194 = vadd.f32 %v170, %v193
  %v195 = vrot.slane %v194, 2
  %v196 = vadd.f32 %v194, %v195
  %v197 = vrot.slane %v196, 1
  %v198 = vadd.f32 %v196, %v197
  %v199 = vrot.slane %v171, 4
  %v200 = vadd.f32 %v171, %v199
  %v201 = vrot.slane %v200, 2
  %v202 = vadd.f32 %v200, %v201
  %v203 = vrot.slane %v202, 1
  %v204 = vadd.f32 %v202, %v203
  %v205 = vrot.slane %v172, 4
  %v206 = vadd.f32 %v172, %v205
  %v207 = vrot.slane %v206, 2
  %v208 = vadd.f32 %v206, %v207
  %v209 = vrot.slane %v208, 1
  %v210 = vadd.f32 %v208, %v209
  %v211 = vrot.slane %v173, 4
  %v212 = vadd.f32 %v173, %v211
  %v213 = vrot.slane %v212, 2
  %v214 = vadd.f32 %v212, %v213
  %v215 = vrot.slane %v214, 1
  %v216 = vadd.f32 %v214, %v215
  %v217 = vrot.slane %v174, 4
  %v218 = vadd.f32 %v174, %v217
  %v219 = vrot.slane %v218, 2
  %v220 = vadd.f32 %v218, %v219
  %v221 = vrot.slane %v220, 1
  %v222 = vadd.f32 %v220, %v221
  %v223 = vmul.f32 %v107, %v107
  %v224 = vmul.f32 %v114, %v114
  %v225 = vmul.f32 %v121, %v121
  %v226 = vmul.f32 %v128, %v128
  %v227 = vmul.f32 %v135, %v135
  %v228 = vmul.f32 %v142, %v142
  %v229 = vmul.f32 %v149, %v149
  %v230 = vmul.f32 %v156, %v156
  %v231 = vsel %vm159, %v223, 0.0
  %v232 = vsel %vm160, %v224, 0.0
  %v233 = vsel %vm161, %v225, 0.0
  %v234 = vsel %vm162, %v226, 0.0
  %v235 = vsel %vm163, %v227, 0.0
  %v236 = vsel %vm164, %v228, 0.0
  %v237 = vsel %vm165, %v229, 0.0
  %v238 = vsel %vm166, %v230, 0.0
  %v239 = vrot.slane %v231, 4
  %v240 = vadd.f32 %v231, %v239
  %v241 = vrot.slane %v240, 2
  %v242 = vadd.f32 %v240, %v241
  %v243 = vrot.slane %v242, 1
  %v244 = vadd.f32 %v242, %v243
  %v245 = vrot.slane %v232, 4
  %v246 = vadd.f32 %v232, %v245
  %v247 = vrot.slane %v246, 2
  %v248 = vadd.f32 %v246, %v247
  %v249 = vrot.slane %v248, 1
  %v250 = vadd.f32 %v248, %v249
  %v251 = vrot.slane %v233, 4
  %v252 = vadd.f32 %v233, %v251
  %v253 = vrot.slane %v252, 2
  %v254 = vadd.f32 %v252, %v253
  %v255 = vrot.slane %v254, 1
  %v256 = vadd.f32 %v254, %v255
  %v257 = vrot.slane %v234, 4
  %v258 = vadd.f32 %v234, %v257
  %v259 = vrot.slane %v258, 2
  %v260 = vadd.f32 %v258, %v259
  %v261 = vrot.slane %v260, 1
  %v262 = vadd.f32 %v260, %v261
  %v263 = vrot.slane %v235, 4
  %v264 = vadd.f32 %v235, %v263
  %v265 = vrot.slane %v264, 2
  %v266 = vadd.f32 %v264, %v265
  %v267 = vrot.slane %v266, 1
  %v268 = vadd.f32 %v266, %v267
  %v269 = vrot.slane %v236, 4
  %v270 = vadd.f32 %v236, %v269
  %v271 = vrot.slane %v270, 2
  %v272 = vadd.f32 %v270, %v271
  %v273 = vrot.slane %v272, 1
  %v274 = vadd.f32 %v272, %v273
  %v275 = vrot.slane %v237, 4
  %v276 = vadd.f32 %v237, %v275
  %v277 = vrot.slane %v276, 2
  %v278 = vadd.f32 %v276, %v277
  %v279 = vrot.slane %v278, 1
  %v280 = vadd.f32 %v278, %v279
  %v281 = vrot.slane %v238, 4
  %v282 = vadd.f32 %v238, %v281
  %v283 = vrot.slane %v282, 2
  %v284 = vadd.f32 %v282, %v283
  %v285 = vrot.slane %v284, 1
  %v286 = vadd.f32 %v284, %v285
  %v287 = vld [vmem:[%s2] sm:$0xff]
  %v288 = vld [vmem:[%s2 + $0x8] sm:$0xff]
  %v289 = vld [vmem:[%s2 + $0x10] sm:$0xff]
  %v290 = vld [vmem:[%s2 + $0x18] sm:$0xff]
  %v291 = vld [vmem:[%s2 + $0x20] sm:$0xff]
  %v292 = vld [vmem:[%s2 + $0x28] sm:$0xff]
  %v293 = vld [vmem:[%s2 + $0x30] sm:$0xff]
  %v294 = vld [vmem:[%s2 + $0x38] sm:$0xff]
  %v295 = vld [vmem:[%s2 + $0x40] sm:$0xff]
  %v296 = vld [vmem:[%s2 + $0x48] sm:$0xff]
  %v297 = vld [vmem:[%s2 + $0x50] sm:$0xff]
  %v298 = vld [vmem:[%s2 + $0x58] sm:$0xff]
  %v299 = vld [vmem:[%s2 + $0x60] sm:$0xff]
  %v300 = vld [vmem:[%s2 + $0x68] sm:$0xff]
  %v301 = vld [vmem:[%s2 + $0x70] sm:$0xff]
  %v302 = vld [vmem:[%s2 + $0x78] sm:$0xff]
  %vm311 = vcmask 1041409
  %v312 = vsel %vm311, %v186, %v180
  %vm313 = vcmask 1042434
  %v314 = vsel %vm313, %v192, %v312
  %vm315 = vcmask 1043459
  %v316 = vsel %vm315, %v198, %v314
  %vm317 = vcmask 1044484
  %v318 = vsel %vm317, %v204, %v316
  %vm319 = vcmask 1045509
  %v320 = vsel %vm319, %v210, %v318
  %vm321 = vcmask 1046534
  %v322 = vsel %vm321, %v216, %v320
  %vm323 = vcmask 1047559
  %v324 = vsel %vm323, %v222, %v322
  %326 = vmatprep.subr.mxu0 0.0
  %327 = vmatpush1.msra.mxu0 %v287
  %328 = vmatprep.subr.mxu0 0.0
  %329 = vmatpush1.msra.mxu0 %v288
  %330 = vmatprep.subr.mxu0 0.0
  %331 = vmatpush1.msra.mxu0 %v289
  %332 = vmatprep.subr.mxu0 0.0
  %333 = vmatpush1.msra.mxu0 %v290
  %334 = vmatprep.subr.mxu0 0.0
  %335 = vmatpush1.msra.mxu0 %v291
  %336 = vmatprep.subr.mxu0 0.0
  %337 = vmatpush1.msra.mxu0 %v292
  %338 = vmatprep.subr.mxu0 0.0
  %339 = vmatpush1.msra.mxu0 %v293
  %340 = vmatprep.subr.mxu0 0.0
  %341 = vmatpush1.msra.mxu0 %v294
  %342 = vmatprep.subr.mxu0 0.0
  %343 = vmatpush1.msra.mxu0 %v295
  %344 = vmatprep.subr.mxu0 0.0
  %345 = vmatpush1.msra.mxu0 %v296
  %346 = vmatprep.subr.mxu0 0.0
  %347 = vmatpush1.msra.mxu0 %v297
  %348 = vmatprep.subr.mxu0 0.0
  %349 = vmatpush1.msra.mxu0 %v298
  %350 = vmatprep.subr.mxu0 0.0
  %351 = vmatpush1.msra.mxu0 %v299
  %352 = vmatprep.subr.mxu0 0.0
  %353 = vmatpush1.msra.mxu0 %v300
  %354 = vmatprep.subr.mxu0 0.0
  %355 = vmatpush1.msra.mxu0 %v301
  %356 = vmatprep.subr.mxu0 0.0
  %357 = vmatpush1.msra.mxu0 %v302
  %358 = vmatprep.subr.mxu0 0.0
  %359 = vmatpush1.msra.mxu0 0.0
  %360 = vmatprep.subr.mxu0 0.0
  %361 = vmatpush1.msra.mxu0 0.0
  %362 = vmatprep.subr.mxu0 0.0
  %363 = vmatpush1.msra.mxu0 0.0
  %364 = vmatprep.subr.mxu0 0.0
  %365 = vmatpush1.msra.mxu0 0.0
  %366 = vmatprep.subr.mxu0 0.0
  %367 = vmatpush1.msra.mxu0 0.0
  %368 = vmatprep.subr.mxu0 0.0
  %369 = vmatpush1.msra.mxu0 0.0
  %370 = vmatprep.subr.mxu0 0.0
  %371 = vmatpush1.msra.mxu0 0.0
  %372 = vmatprep.subr.mxu0 0.0
  %373 = vmatpush1.msra.mxu0 0.0
  %374 = vmatprep.subr.mxu0 0.0
  %375 = vmatpush1.msra.mxu0 0.0
  %376 = vmatprep.subr.mxu0 0.0
  %377 = vmatpush1.msra.mxu0 0.0
  %378 = vmatprep.subr.mxu0 0.0
  %379 = vmatpush1.msra.mxu0 0.0
  %380 = vmatprep.subr.mxu0 0.0
  %381 = vmatpush1.msra.mxu0 0.0
  %382 = vmatprep.subr.mxu0 0.0
  %383 = vmatpush1.msra.mxu0 0.0
  %384 = vmatprep.subr.mxu0 0.0
  %385 = vmatpush1.msra.mxu0 0.0
  %386 = vmatprep.subr.mxu0 0.0
  %387 = vmatpush1.msra.mxu0 0.0
  %388 = vmatprep.subr.mxu0 0.0
  %389 = vmatpush1.msra.mxu0 0.0
  %390 = vmatprep.mubr.f32.mxu0 0.0
  %391 = vmatmul.mubr.f32.gmra.mrb[0].mxu0 %v324
  %v392 = vpop.f32.mrb[0].mxu0
  %v393 = vadd.f32 0.0, %v392
  %v394 = vpop.f32.mrb[0].mxu0
  %395 = vdwg.mxu0
  %v396 = vld [vmem:[%s3] sm:$0xff]
  %v397 = vld [vmem:[%s3 + $0x8] sm:$0xff]
  %v398 = vld [vmem:[%s3 + $0x10] sm:$0xff]
  %v399 = vld [vmem:[%s3 + $0x18] sm:$0xff]
  %v400 = vld [vmem:[%s3 + $0x20] sm:$0xff]
  %v401 = vld [vmem:[%s3 + $0x28] sm:$0xff]
  %v402 = vld [vmem:[%s3 + $0x30] sm:$0xff]
  %v403 = vld [vmem:[%s3 + $0x38] sm:$0xff]
  %v404 = vld [vmem:[%s3 + $0x40] sm:$0xff]
  %v405 = vld [vmem:[%s3 + $0x48] sm:$0xff]
  %v406 = vld [vmem:[%s3 + $0x50] sm:$0xff]
  %v407 = vld [vmem:[%s3 + $0x58] sm:$0xff]
  %v408 = vld [vmem:[%s3 + $0x60] sm:$0xff]
  %v409 = vld [vmem:[%s3 + $0x68] sm:$0xff]
  %v410 = vld [vmem:[%s3 + $0x70] sm:$0xff]
  %v411 = vld [vmem:[%s3 + $0x78] sm:$0xff]
  %v420 = vsel %vm311, %v250, %v244
  %v421 = vsel %vm313, %v256, %v420
  %v422 = vsel %vm315, %v262, %v421
  %v423 = vsel %vm317, %v268, %v422
  %v424 = vsel %vm319, %v274, %v423
  %v425 = vsel %vm321, %v280, %v424
  %v426 = vsel %vm323, %v286, %v425
  %428 = vmatprep.subr.mxu0 0.0
  %429 = vmatpush1.msra.mxu0 %v396
  %430 = vmatprep.subr.mxu0 0.0
  %431 = vmatpush1.msra.mxu0 %v397
  %432 = vmatprep.subr.mxu0 0.0
  %433 = vmatpush1.msra.mxu0 %v398
  %434 = vmatprep.subr.mxu0 0.0
  %435 = vmatpush1.msra.mxu0 %v399
  %436 = vmatprep.subr.mxu0 0.0
  %437 = vmatpush1.msra.mxu0 %v400
  %438 = vmatprep.subr.mxu0 0.0
  %439 = vmatpush1.msra.mxu0 %v401
  %440 = vmatprep.subr.mxu0 0.0
  %441 = vmatpush1.msra.mxu0 %v402
  %442 = vmatprep.subr.mxu0 0.0
  %443 = vmatpush1.msra.mxu0 %v403
  %444 = vmatprep.subr.mxu0 0.0
  %445 = vmatpush1.msra.mxu0 %v404
  %446 = vmatprep.subr.mxu0 0.0
  %447 = vmatpush1.msra.mxu0 %v405
  %448 = vmatprep.subr.mxu0 0.0
  %449 = vmatpush1.msra.mxu0 %v406
  %450 = vmatprep.subr.mxu0 0.0
  %451 = vmatpush1.msra.mxu0 %v407
  %452 = vmatprep.subr.mxu0 0.0
  %453 = vmatpush1.msra.mxu0 %v408
  %454 = vmatprep.subr.mxu0 0.0
  %455 = vmatpush1.msra.mxu0 %v409
  %456 = vmatprep.subr.mxu0 0.0
  %457 = vmatpush1.msra.mxu0 %v410
  %458 = vmatprep.subr.mxu0 0.0
  %459 = vmatpush1.msra.mxu0 %v411
  %460 = vmatprep.subr.mxu0 0.0
  %461 = vmatpush1.msra.mxu0 0.0
  %462 = vmatprep.subr.mxu0 0.0
  %463 = vmatpush1.msra.mxu0 0.0
  %464 = vmatprep.subr.mxu0 0.0
  %465 = vmatpush1.msra.mxu0 0.0
  %466 = vmatprep.subr.mxu0 0.0
  %467 = vmatpush1.msra.mxu0 0.0
  %468 = vmatprep.subr.mxu0 0.0
  %469 = vmatpush1.msra.mxu0 0.0
  %470 = vmatprep.subr.mxu0 0.0
  %471 = vmatpush1.msra.mxu0 0.0
  %472 = vmatprep.subr.mxu0 0.0
  %473 = vmatpush1.msra.mxu0 0.0
  %474 = vmatprep.subr.mxu0 0.0
  %475 = vmatpush1.msra.mxu0 0.0
  %476 = vmatprep.subr.mxu0 0.0
  %477 = vmatpush1.msra.mxu0 0.0
  %478 = vmatprep.subr.mxu0 0.0
  %479 = vmatpush1.msra.mxu0 0.0
  %480 = vmatprep.subr.mxu0 0.0
  %481 = vmatpush1.msra.mxu0 0.0
  %482 = vmatprep.subr.mxu0 0.0
  %483 = vmatpush1.msra.mxu0 0.0
  %484 = vmatprep.subr.mxu0 0.0
  %485 = vmatpush1.msra.mxu0 0.0
  %486 = vmatprep.subr.mxu0 0.0
  %487 = vmatpush1.msra.mxu0 0.0
  %488 = vmatprep.subr.mxu0 0.0
  %489 = vmatpush1.msra.mxu0 0.0
  %490 = vmatprep.subr.mxu0 0.0
  %491 = vmatpush1.msra.mxu0 0.0
  %492 = vmatprep.mubr.f32.mxu0 0.0
  %493 = vmatmul.mubr.f32.gmra.mrb[0].mxu0 %v426
  %v494 = vpop.f32.mrb[0].mxu0
  %v495 = vadd.f32 0.0, %v494
  %v496 = vpop.f32.mrb[0].mxu0
  %497 = vdwg.mxu0
  %v498 = vmul.f32 %v393, %v393
  %v499 = vsub.f32 %v498, %v495
  %v500 = vmul.f32 %v499, 0.5
  %v501 = vld [vmem:[%s4] sm:$0x1]
  %v503 = vlaneseq
  %v504 = vshrl.u32 %v503, 7
  %v505 = vsub.s32 0, %v504
  %v506 = vrot.slane %v501, %v505
  %v508 = vmul.f32 %v500, %v506
  %v509 = vld [vmem:[%s5] sm:$0x1]
  %v511 = vlaneseq
  %v512 = vshrl.u32 %v511, 7
  %v513 = vsub.s32 0, %v512
  %v514 = vrot.slane %v509, %v513
  %v516 = vadd.f32 %v508, %v514
  %v517 = vld [vmem:[%s6] sm:$0xff]
  %v518 = vld [vmem:[%s6 + $0x8] sm:$0xff]
  %v519 = vld [vmem:[%s6 + $0x10] sm:$0xff]
  %v520 = vld [vmem:[%s6 + $0x18] sm:$0xff]
  %v521 = vld [vmem:[%s7] sm:$0x1]
  %v523 = vlaneseq
  %v524 = vshrl.u32 %v523, 7
  %v525 = vsub.s32 0, %v524
  %v526 = vrot.slane %v521, %v525
  %vm528 = vcmask 261120
  %v530 = vsel %vm528, %v516, 0
  %532 = vmatprep.subr.mxu0 0.0
  %533 = vmatpush1.msra.mxu0 %v517
  %534 = vmatprep.subr.mxu0 0.0
  %535 = vmatpush1.msra.mxu0 %v518
  %536 = vmatprep.subr.mxu0 0.0
  %537 = vmatpush1.msra.mxu0 %v519
  %538 = vmatprep.subr.mxu0 0.0
  %539 = vmatpush1.msra.mxu0 %v520
  %540 = vmatprep.subr.mxu0 0.0
  %541 = vmatpush1.msra.mxu0 0.0
  %542 = vmatprep.subr.mxu0 0.0
  %543 = vmatpush1.msra.mxu0 0.0
  %544 = vmatprep.subr.mxu0 0.0
  %545 = vmatpush1.msra.mxu0 0.0
  %546 = vmatprep.subr.mxu0 0.0
  %547 = vmatpush1.msra.mxu0 0.0
  %548 = vmatprep.subr.mxu0 0.0
  %549 = vmatpush1.msra.mxu0 0.0
  %550 = vmatprep.subr.mxu0 0.0
  %551 = vmatpush1.msra.mxu0 0.0
  %552 = vmatprep.subr.mxu0 0.0
  %553 = vmatpush1.msra.mxu0 0.0
  %554 = vmatprep.subr.mxu0 0.0
  %555 = vmatpush1.msra.mxu0 0.0
  %556 = vmatprep.subr.mxu0 0.0
  %557 = vmatpush1.msra.mxu0 0.0
  %558 = vmatprep.subr.mxu0 0.0
  %559 = vmatpush1.msra.mxu0 0.0
  %560 = vmatprep.subr.mxu0 0.0
  %561 = vmatpush1.msra.mxu0 0.0
  %562 = vmatprep.subr.mxu0 0.0
  %563 = vmatpush1.msra.mxu0 0.0
  %564 = vmatprep.subr.mxu0 0.0
  %565 = vmatpush1.msra.mxu0 0.0
  %566 = vmatprep.subr.mxu0 0.0
  %567 = vmatpush1.msra.mxu0 0.0
  %568 = vmatprep.subr.mxu0 0.0
  %569 = vmatpush1.msra.mxu0 0.0
  %570 = vmatprep.subr.mxu0 0.0
  %571 = vmatpush1.msra.mxu0 0.0
  %572 = vmatprep.subr.mxu0 0.0
  %573 = vmatpush1.msra.mxu0 0.0
  %574 = vmatprep.subr.mxu0 0.0
  %575 = vmatpush1.msra.mxu0 0.0
  %576 = vmatprep.subr.mxu0 0.0
  %577 = vmatpush1.msra.mxu0 0.0
  %578 = vmatprep.subr.mxu0 0.0
  %579 = vmatpush1.msra.mxu0 0.0
  %580 = vmatprep.subr.mxu0 0.0
  %581 = vmatpush1.msra.mxu0 0.0
  %582 = vmatprep.subr.mxu0 0.0
  %583 = vmatpush1.msra.mxu0 0.0
  %584 = vmatprep.subr.mxu0 0.0
  %585 = vmatpush1.msra.mxu0 0.0
  %586 = vmatprep.subr.mxu0 0.0
  %587 = vmatpush1.msra.mxu0 0.0
  %588 = vmatprep.subr.mxu0 0.0
  %589 = vmatpush1.msra.mxu0 0.0
  %590 = vmatprep.subr.mxu0 0.0
  %591 = vmatpush1.msra.mxu0 0.0
  %592 = vmatprep.subr.mxu0 0.0
  %593 = vmatpush1.msra.mxu0 0.0
  %594 = vmatprep.subr.mxu0 0.0
  %595 = vmatpush1.msra.mxu0 0.0
  %596 = vmatprep.mubr.f32.mxu0 0.0
  %597 = vmatmul.mubr.f32.gmra.mrb[0].mxu0 %v530
  %v598 = vpop.f32.mrb[0].mxu0
  %v599 = vadd.f32 %v526, %v598
  %v600 = vpop.f32.mrb[0].mxu0
  %601 = vdwg.mxu0
  %v602 = vmax.f32 %v599, 0.0
  %v603 = vld [vmem:[%s8] sm:$0xff]
  %v604 = vld [vmem:[%s8 + $0x8] sm:$0xff]
  %v605 = vld [vmem:[%s8 + $0x10] sm:$0xff]
  %v606 = vld [vmem:[%s8 + $0x18] sm:$0xff]
  %v607 = vld [vmem:[%s8 + $0x20] sm:$0xff]
  %v608 = vld [vmem:[%s8 + $0x28] sm:$0xff]
  %v609 = vld [vmem:[%s8 + $0x30] sm:$0xff]
  %v610 = vld [vmem:[%s8 + $0x38] sm:$0xff]
  %v611 = vld [vmem:[%s9] sm:$0x1]
  %v613 = vlaneseq
  %v614 = vshrl.u32 %v613, 7
  %v615 = vsub.s32 0, %v614
  %v616 = vrot.slane %v611, %v615
  %vm618 = vcmask 523264
  %v620 = vsel %vm618, %v602, 0
  %622 = vmatprep.subr.mxu0 0.0
  %623 = vmatpush1.msra.mxu0 %v603
  %624 = vmatprep.subr.mxu0 0.0
  %625 = vmatpush1.msra.mxu0 %v604
  %626 = vmatprep.subr.mxu0 0.0
  %627 = vmatpush1.msra.mxu0 %v605
  %628 = vmatprep.subr.mxu0 0.0
  %629 = vmatpush1.msra.mxu0 %v606
  %630 = vmatprep.subr.mxu0 0.0
  %631 = vmatpush1.msra.mxu0 %v607
  %632 = vmatprep.subr.mxu0 0.0
  %633 = vmatpush1.msra.mxu0 %v608
  %634 = vmatprep.subr.mxu0 0.0
  %635 = vmatpush1.msra.mxu0 %v609
  %636 = vmatprep.subr.mxu0 0.0
  %637 = vmatpush1.msra.mxu0 %v610
  %638 = vmatprep.subr.mxu0 0.0
  %639 = vmatpush1.msra.mxu0 0.0
  %640 = vmatprep.subr.mxu0 0.0
  %641 = vmatpush1.msra.mxu0 0.0
  %642 = vmatprep.subr.mxu0 0.0
  %643 = vmatpush1.msra.mxu0 0.0
  %644 = vmatprep.subr.mxu0 0.0
  %645 = vmatpush1.msra.mxu0 0.0
  %646 = vmatprep.subr.mxu0 0.0
  %647 = vmatpush1.msra.mxu0 0.0
  %648 = vmatprep.subr.mxu0 0.0
  %649 = vmatpush1.msra.mxu0 0.0
  %650 = vmatprep.subr.mxu0 0.0
  %651 = vmatpush1.msra.mxu0 0.0
  %652 = vmatprep.subr.mxu0 0.0
  %653 = vmatpush1.msra.mxu0 0.0
  %654 = vmatprep.subr.mxu0 0.0
  %655 = vmatpush1.msra.mxu0 0.0
  %656 = vmatprep.subr.mxu0 0.0
  %657 = vmatpush1.msra.mxu0 0.0
  %658 = vmatprep.subr.mxu0 0.0
  %659 = vmatpush1.msra.mxu0 0.0
  %660 = vmatprep.subr.mxu0 0.0
  %661 = vmatpush1.msra.mxu0 0.0
  %662 = vmatprep.subr.mxu0 0.0
  %663 = vmatpush1.msra.mxu0 0.0
  %664 = vmatprep.subr.mxu0 0.0
  %665 = vmatpush1.msra.mxu0 0.0
  %666 = vmatprep.subr.mxu0 0.0
  %667 = vmatpush1.msra.mxu0 0.0
  %668 = vmatprep.subr.mxu0 0.0
  %669 = vmatpush1.msra.mxu0 0.0
  %670 = vmatprep.subr.mxu0 0.0
  %671 = vmatpush1.msra.mxu0 0.0
  %672 = vmatprep.subr.mxu0 0.0
  %673 = vmatpush1.msra.mxu0 0.0
  %674 = vmatprep.subr.mxu0 0.0
  %675 = vmatpush1.msra.mxu0 0.0
  %676 = vmatprep.subr.mxu0 0.0
  %677 = vmatpush1.msra.mxu0 0.0
  %678 = vmatprep.subr.mxu0 0.0
  %679 = vmatpush1.msra.mxu0 0.0
  %680 = vmatprep.subr.mxu0 0.0
  %681 = vmatpush1.msra.mxu0 0.0
  %682 = vmatprep.subr.mxu0 0.0
  %683 = vmatpush1.msra.mxu0 0.0
  %684 = vmatprep.subr.mxu0 0.0
  %685 = vmatpush1.msra.mxu0 0.0
  %686 = vmatprep.mubr.f32.mxu0 0.0
  %687 = vmatmul.mubr.f32.gmra.mrb[0].mxu0 %v620
  %v688 = vpop.f32.mrb[0].mxu0
  %v689 = vadd.f32 %v616, %v688
  %v690 = vpop.f32.mrb[0].mxu0
  %691 = vdwg.mxu0
  %v692 = vmax.f32 %v689, 0.0
  %v693 = vld [vmem:[%s10] sm:$0x1]
  %v695 = vlaneseq
  %v696 = vshrl.u32 %v695, 7
  %v697 = vsub.s32 0, %v696
  %v698 = vrot.slane %v693, %v697
  %v700 = vmul.f32 %v692, %v698
  %v701 = vsel %vm528, %v700, 0.0
  %702 = vadd.xlane.f32.xlu0 %v701
  %v703 = vpop.xlane.xlu0 %702
  %v704 = vld [vmem:[#allocation2] sm:$0x1]
  %v706 = vlaneseq
  %v707 = vshrl.u32 %v706, 7
  %v708 = vsub.s32 0, %v707
  %v709 = vrot.slane %v704, %v708
  %v711 = vadd.f32 %v703, %v709
  %vm712 = vcmask 7168
  %713 = vst.msk [vmem:[%s12] sm:$0xff] %vm712, %v711
  // Predicated region
  $region50: #{tpu_custom_call.1} parent=0 // pred_check
    _
  $region51: #{tpu_custom_call.1} parent=0 // pred_check_branch
    %715 = sbr.rel (0) target = $region53
  $region52: #{tpu_custom_call.1} parent=0 // pred_region
    _
  $region53: #{tpu_custom_call.1} parent=0 // pred_fallthru
    _
  // Predicated region
  $region54: #{tpu_custom_call.1} parent=0 // pred_check
    _
  $region55: #{tpu_custom_call.1} parent=0 // pred_check_branch
    %717 = sbr.rel (0) target = $region57
  $region56: #{tpu_custom_call.1} parent=0 // pred_region
    _
  $region57: #{tpu_custom_call.1} parent=0 // pred_fallthru
    _

</llo_original>
